<compile_context>
chip_gen: v5e
topology: v5e:2x2
jax: 0.10.0
libtpu: 0.0.40
codegen_flags: <defaults>
</compile_context>

<pallas_src>
import numpy as np
import jax
import jax.numpy as jnp
from jax.experimental import pallas as pl
from jax.experimental.pallas import tpu as pltpu

LANE = 128
TARGET_BLOCK_BYTES = 2 * 1024 * 1024    # ~2 MiB output block per grid step
VMEM_BUDGET = 24 * 1024 * 1024          # resident double-buffered blocks (v7x-safe)
VMEM_LIMIT = 48 * 1024 * 1024           # scoped limit handed to Mosaic


def _concat_kernel_2d(lane_offsets):
    """Copy each input ref into its static lane slice of the 2-D output block."""
    offs = tuple(int(o) for o in lane_offsets)

    def kernel(*refs):
        in_refs, out_ref = refs[:-1], refs[-1]
        for i, r in enumerate(in_refs):
            out_ref[:, offs[i]:offs[i + 1]] = r[...]     # static lane slice

    return kernel


def _concat_kernel_3d(channel_offsets):
    """Fallback: copy each input into its channel slice (sublane axis)."""
    offs = tuple(int(o) for o in channel_offsets)

    def kernel(*refs):
        in_refs, out_ref = refs[:-1], refs[-1]
        for i, r in enumerate(in_refs):
            out_ref[:, offs[i]:offs[i + 1], :] = r[...]

    return kernel


def concat(xs, dimension=1):
    """Pallas equivalent of torch.cat(xs, dim=dimension)."""
    xs = list(xs)
    assert len(xs) >= 1
    if len(xs) == 1:
        return xs[0]

    shape0 = xs[0].shape
    nd = len(shape0)
    d = dimension if dimension >= 0 else dimension + nd
    assert 0 <= d < nd
    dtype = xs[0].dtype
    for x in xs:
        assert x.ndim == nd and x.dtype == dtype
        for ax in range(nd):
            if ax != d:
                assert x.shape[ax] == shape0[ax]

    cs = [int(x.shape[d]) for x in xs]
    c_total = int(sum(cs))
    offs = [int(o) for o in np.cumsum([0] + cs)]
    out_shape_full = tuple(shape0[:d]) + (c_total,) + tuple(shape0[d + 1:])

    rows = int(np.prod(shape0[:d], dtype=np.int64)) if d > 0 else 1
    rest = int(np.prod(shape0[d + 1:], dtype=np.int64)) if d + 1 < nd else 1

    itemsize = jnp.dtype(dtype).itemsize
    packing = max(8, 32 // itemsize)             # sublanes per packed vreg column

    row_bytes = c_total * rest * itemsize        # one flattened output row
    resident_per_row = 4 * row_bytes             # 2x inputs + 2x output, double-buffered

    if max(1, min(rows, packing)) * resident_per_row <= VMEM_BUDGET:
        # ---------- primary path: 2-D lane-aligned concat -------------------
        if rows <= packing:
            B = rows                             # block == full row extent (always legal)
        else:
            b_cap = min(max(1, TARGET_BLOCK_BYTES // row_bytes),
                        max(1, VMEM_BUDGET // resident_per_row))
            B = max(packing, (min(rows, b_cap) // packing) * packing)
        grid_r = pl.cdiv(rows, B)                # ragged tail block is edge-masked

        xs2 = [x.reshape(rows, c * rest) for x, c in zip(xs, cs)]
        kernel = _concat_kernel_2d([o * rest for o in offs])
        in_specs = [pl.BlockSpec((B, c * rest), lambda r: (r, 0)) for c in cs]
        out_spec = pl.BlockSpec((B, c_total * rest), lambda r: (r, 0))

        out2 = pl.pallas_call(
            kernel,
            out_shape=jax.ShapeDtypeStruct((rows, c_total * rest), dtype),
            grid=(grid_r,),
            in_specs=in_specs,
            out_specs=out_spec,
            compiler_params=pltpu.CompilerParams(
                dimension_semantics=("parallel",),
                vmem_limit_bytes=VMEM_LIMIT,
            ),
        )(*xs2)
        return out2.reshape(out_shape_full)

    # ---------- fallback: feature-tiled 3-D concat (huge tensors) -----------
    # One flattened row slab would not fit the VMEM budget, so keep the
    # (rows, C, rest) layout and tile the trailing lane axis with a second
    # "parallel" grid axis.  Channel offsets may be sublane-misaligned for odd
    # channel counts (masked stores), but this path only triggers at sizes
    # where channel counts are normally multiples of 8/16 anyway.
    B = max(1, min(rows, packing))
    denom = 4 * B * c_total * itemsize
    t_budget = max(LANE, (VMEM_BUDGET // max(1, denom)) // LANE * LANE)
    T = min(rest, t_budget)
    grid = (pl.cdiv(rows, B), pl.cdiv(rest, T))  # edge blocks masked by Pallas

    xs3 = [x.reshape(rows, c, rest) for x, c in zip(xs, cs)]
    kernel = _concat_kernel_3d(offs)
    in_specs = [pl.BlockSpec((B, c, T), lambda r, j: (r, 0, j)) for c in cs]
    out_spec = pl.BlockSpec((B, c_total, T), lambda r, j: (r, 0, j))

    out3 = pl.pallas_call(
        kernel,
        out_shape=jax.ShapeDtypeStruct((rows, c_total, rest), dtype),
        grid=grid,
        in_specs=in_specs,
        out_specs=out_spec,
        compiler_params=pltpu.CompilerParams(
            dimension_semantics=("parallel", "parallel"),
            vmem_limit_bytes=VMEM_LIMIT,
        ),
    )(*xs3)
    return out3.reshape(out_shape_full)


if __name__ == "__main__":
    key = jax.random.PRNGKey(0)
    k1, k2, k3, k4, k5, k6, k7 = jax.random.split(key, 7)

    # 1) channel concat (dim=1), NCHW, YOLO-style differing channel counts
    x1 = jax.random.normal(k1, (2, 4, 16, 16), dtype=jnp.float32)
    x2 = jax.random.normal(k2, (2, 6, 16, 16), dtype=jnp.float32)
    x3 = jax.random.normal(k3, (2, 2, 16, 16), dtype=jnp.float32)
    out = jax.block_until_ready(concat([x1, x2, x3], dimension=1))
    ref = jnp.concatenate([x1, x2, x3], axis=1)
    assert out.shape == ref.shape, (out.shape, ref.shape)
    assert jnp.array_equal(out, ref), "dim=1 concat mismatch vs jnp.concatenate"

    # 2) arbitrary `dimension`; sanity-check another axis
    y1 = jax.random.normal(k4, (2, 4, 8, 16), dtype=jnp.float32)
    y2 = jax.random.normal(k5, (2, 4, 12, 16), dtype=jnp.float32)
    out2 = jax.block_until_ready(concat([y1, y2], dimension=2))
    ref2 = jnp.concatenate([y1, y2], axis=2)
    assert out2.shape == ref2.shape, (out2.shape, ref2.shape)
    assert jnp.array_equal(out2, ref2), "dim=2 concat mismatch vs jnp.concatenate"

    # 3) row count (2*5=10) not a multiple of the 8-row block -> edge-masked block
    z1 = jax.random.normal(k6, (2, 5, 8, 16), dtype=jnp.float32)
    z2 = jax.random.normal(k7, (2, 5, 12, 16), dtype=jnp.float32)
    out3 = jax.block_until_ready(concat([z1, z2], dimension=2))
    ref3 = jnp.concatenate([z1, z2], axis=2)
    assert out3.shape == ref3.shape, (out3.shape, ref3.shape)
    assert jnp.array_equal(out3, ref3), "ragged-rows concat mismatch"

    # 4) bf16 (sublane-packed dtype)
    b1 = x1.astype(jnp.bfloat16)
    b2 = x2.astype(jnp.bfloat16)
    out4 = jax.block_until_ready(concat([b1, b2], dimension=1))
    ref4 = jnp.concatenate([b1, b2], axis=1)
    assert out4.shape == ref4.shape, (out4.shape, ref4.shape)
    assert jnp.array_equal(out4, ref4), "bf16 concat mismatch"

    print("KERNEL_OK")
</pallas_src>

<mosaic_0001>
module attributes {stable_mosaic.version = 11 : i64} {
  func.func @kernel(%arg0: i32, %arg1: memref<2x1024xf32, #tpu.memory_space<vmem>>, %arg2: memref<2x1536xf32, #tpu.memory_space<vmem>>, %arg3: memref<2x512xf32, #tpu.memory_space<vmem>>, %arg4: memref<2x3072xf32, #tpu.memory_space<vmem>>) attributes {dimension_semantics = [#tpu.dimension_semantics<parallel>], iteration_bounds = array<i64: 1>, scalar_prefetch = 0 : i64, scratch_operands = 0 : i64, tpu.core_type = #tpu.core_type<tc>, window_params = [{transform_indices = @transform_0, window_bounds = array<i64: 2, 1024>}, {transform_indices = @transform_1, window_bounds = array<i64: 2, 1536>}, {transform_indices = @transform_2, window_bounds = array<i64: 2, 512>}, {transform_indices = @transform_3, window_bounds = array<i64: 2, 3072>}]} {
    %c0 = arith.constant 0 : index
    %c0_0 = arith.constant 0 : index
    %0 = vector.load %arg1[%c0, %c0_0] : memref<2x1024xf32, #tpu.memory_space<vmem>>, vector<2x1024xf32>
    %c0_1 = arith.constant 0 : index
    %c0_2 = arith.constant 0 : index
    %1 = vector.load %arg4[%c0_1, %c0_2] : memref<2x3072xf32, #tpu.memory_space<vmem>>, vector<2x1024xf32>
    tpu.vector_store %arg4[%c0_1, %c0_2], %0 {strides = array<i32>} : memref<2x3072xf32, #tpu.memory_space<vmem>>, vector<2x1024xf32>,
    %c0_3 = arith.constant 0 : index
    %c0_4 = arith.constant 0 : index
    %2 = vector.load %arg2[%c0_3, %c0_4] : memref<2x1536xf32, #tpu.memory_space<vmem>>, vector<2x1536xf32>
    %c0_5 = arith.constant 0 : index
    %c1024 = arith.constant 1024 : index
    %3 = vector.load %arg4[%c0_5, %c1024] : memref<2x3072xf32, #tpu.memory_space<vmem>>, vector<2x1536xf32>
    tpu.vector_store %arg4[%c0_5, %c1024], %2 {strides = array<i32>} : memref<2x3072xf32, #tpu.memory_space<vmem>>, vector<2x1536xf32>,
    %c0_6 = arith.constant 0 : index
    %c0_7 = arith.constant 0 : index
    %4 = vector.load %arg3[%c0_6, %c0_7] : memref<2x512xf32, #tpu.memory_space<vmem>>, vector<2x512xf32>
    %c0_8 = arith.constant 0 : index
    %c2560 = arith.constant 2560 : index
    %5 = vector.load %arg4[%c0_8, %c2560] : memref<2x3072xf32, #tpu.memory_space<vmem>>, vector<2x512xf32>
    tpu.vector_store %arg4[%c0_8, %c2560], %4 {strides = array<i32>} : memref<2x3072xf32, #tpu.memory_space<vmem>>, vector<2x512xf32>,
    return
  }
  func.func @transform_0(%arg0: i32) -> (i32, i32) {
    %c0_i32 = arith.constant 0 : i32
    %c0_i32_0 = arith.constant 0 : i32
    return %arg0, %c0_i32 : i32, i32
  }
  func.func @transform_1(%arg0: i32) -> (i32, i32) {
    %c0_i32 = arith.constant 0 : i32
    %c0_i32_0 = arith.constant 0 : i32
    return %arg0, %c0_i32 : i32, i32
  }
  func.func @transform_2(%arg0: i32) -> (i32, i32) {
    %c0_i32 = arith.constant 0 : i32
    %c0_i32_0 = arith.constant 0 : i32
    return %arg0, %c0_i32 : i32, i32
  }
  func.func @transform_3(%arg0: i32) -> (i32, i32) {
    %c0_i32 = arith.constant 0 : i32
    %c0_i32_0 = arith.constant 0 : i32
    return %arg0, %c0_i32 : i32, i32
  }
}

</mosaic_0001>

<llo_original>
// kernel: tpu_custom_call.1
$region0: #{tpu_custom_call.1}
  #allocation0 [shape = 'u32[]', space=smem, size = 0x4, offset = 0x4, fixed_abs, tag = 'smem constant byte address 0x4 - core index']
  #allocation1 [shape = 'u32[72,128]{1,0:T(1,128)}', space=vmem, size = 0x9000, scoped, tag = 'internal scratch']
  %s0 = inlined_call_operand.hbm [shape: f32[2,1024], index: 0, kind: input, shape index: {}]
  %s1 = inlined_call_operand.hbm [shape: f32[2,1536], index: 1, kind: input, shape index: {}]
  %s2 = inlined_call_operand.hbm [shape: f32[2,512], index: 2, kind: input, shape index: {}]
  %s3 = inlined_call_operand.hbm [shape: f32[2,3072], index: 3, kind: output, shape index: {}]
  %s4 = sld [smem:[#allocation0]]
  $region34: #{tpu_custom_call.1} parent=0
    _
  %s6 = ssub.s32 1, %s4
  %s7 = scalar_select 0, %s6, %s4
  $region1: #{tpu_custom_call.1} parent=0
    #allocation2 [shape = 'u8[8192]{0}', space=vmem, size = 0x2000, scoped, tag = 'input window, operand 0, single buffered']
    #allocation3 [shape = 's32[1]{0}', space=sflag, size = 0x4, scoped, tag = 'scoped memory for tpu_custom_call.1']
    #allocation4 [shape = 's32[1]{0}', space=sflag, size = 0x4, scoped, tag = 'scoped memory for tpu_custom_call.1']
    #allocation5 [shape = 'u8[12288]{0}', space=vmem, size = 0x3000, scoped, tag = 'input window, operand 1, single buffered']
    #allocation6 [shape = 's32[1]{0}', space=sflag, size = 0x4, scoped, tag = 'scoped memory for tpu_custom_call.1']
    #allocation7 [shape = 'u8[4096]{0}', space=vmem, size = 0x1000, scoped, tag = 'input window, operand 2, single buffered']
    #allocation8 [shape = 'u8[24576]{0}', space=vmem, size = 0x6000, scoped, tag = 'output window, operand 0, single buffered']
    %8 = vsyncpa [#allocation3], 0
    %9 = vsyncpa [#allocation6], 0
    %10 = vsyncpa [#allocation4], 0
    // Predicated region
    $region2: #{tpu_custom_call.1} parent=1 // pred_check
      _
    $region3: #{tpu_custom_call.1} parent=1 // pred_check_branch
      %12 = sbr.rel (0) target = $region5
    $region4: #{tpu_custom_call.1} parent=1 // pred_region
      %14 = vsyncadd [#allocation3], 0
      %s16 = sshll.u32 %s0, 4
      %s17 = int_to_ptr.hbm [resolvable:$true] %s16
      %s18 = sshll.u32 [#allocation2], 4
      %s19 = int_to_ptr.vmem [resolvable:$true] %s18
      %21 = dma.hbm_to_vmem [thread:$0]  %s17, 256, %s19, [#allocation3]
    $region5: #{tpu_custom_call.1} parent=1 // pred_fallthru
      _
    // Predicated region
    $region6: #{tpu_custom_call.1} parent=1 // pred_check
      _
    $region7: #{tpu_custom_call.1} parent=1 // pred_check_branch
      %23 = sbr.rel (0) target = $region9
    $region8: #{tpu_custom_call.1} parent=1 // pred_region
      %25 = vsyncadd [#allocation6], 0
      %s27 = sshll.u32 %s1, 4
      %s28 = int_to_ptr.hbm [resolvable:$true] %s27
      %s29 = sshll.u32 [#allocation5], 4
      %s30 = int_to_ptr.vmem [resolvable:$true] %s29
      %32 = dma.hbm_to_vmem [thread:$0]  %s28, 384, %s30, [#allocation6]
    $region9: #{tpu_custom_call.1} parent=1 // pred_fallthru
      _
    // Predicated region
    $region10: #{tpu_custom_call.1} parent=1 // pred_check
      _
    $region11: #{tpu_custom_call.1} parent=1 // pred_check_branch
      %34 = sbr.rel (0) target = $region13
    $region12: #{tpu_custom_call.1} parent=1 // pred_region
      %36 = vsyncadd [#allocation6], 0
      %s38 = sshll.u32 %s2, 4
      %s39 = int_to_ptr.hbm [resolvable:$true] %s38
      %s40 = sshll.u32 [#allocation7], 4
      %s41 = int_to_ptr.vmem [resolvable:$true] %s40
      %43 = dma.hbm_to_vmem [thread:$0]  %s39, 128, %s41, [#allocation6]
    $region13: #{tpu_custom_call.1} parent=1 // pred_fallthru
      _
    // Predicated region
    $region14: #{tpu_custom_call.1} parent=1 // pred_check
      _
    $region15: #{tpu_custom_call.1} parent=1 // pred_check_branch
      %45 = sbr.rel (0) target = $region17
    $region16: #{tpu_custom_call.1} parent=1 // pred_region
      %47 = dma.done [#allocation3], 256
    $region17: #{tpu_custom_call.1} parent=1 // pred_fallthru
      _
    // Predicated region
    $region18: #{tpu_custom_call.1} parent=1 // pred_check
      _
    $region19: #{tpu_custom_call.1} parent=1 // pred_check_branch
      %49 = sbr.rel (0) target = $region21
    $region20: #{tpu_custom_call.1} parent=1 // pred_region
      %51 = dma.done [#allocation6], 384
    $region21: #{tpu_custom_call.1} parent=1 // pred_fallthru
      _
    // Predicated region
    $region22: #{tpu_custom_call.1} parent=1 // pred_check
      _
    $region23: #{tpu_custom_call.1} parent=1 // pred_check_branch
      %53 = sbr.rel (0) target = $region25
    $region24: #{tpu_custom_call.1} parent=1 // pred_region
      %55 = dma.done [#allocation6], 128
    $region25: #{tpu_custom_call.1} parent=1 // pred_fallthru
      _
    %v56 = vld [vmem:[#allocation2] sm:$0xff]
    %v57 = vld [vmem:[#allocation2 + $0x8] sm:$0xff]
    %58 = vst [vmem:[#allocation8] sm:$0xff] %v56
    %59 = vst [vmem:[#allocation8 + $0x8] sm:$0xff] %v57
    %v60 = vld [vmem:[#allocation5] sm:$0xff]
    %v61 = vld [vmem:[#allocation5 + $0x8] sm:$0xff]
    %v62 = vld [vmem:[#allocation5 + $0x10] sm:$0xff]
    %63 = vst [vmem:[#allocation8 + $0x10] sm:$0xff] %v60
    %64 = vst [vmem:[#allocation8 + $0x18] sm:$0xff] %v61
    %65 = vst [vmem:[#allocation8 + $0x20] sm:$0xff] %v62
    %v66 = vld [vmem:[#allocation7] sm:$0xff]
    %67 = vst [vmem:[#allocation8 + $0x28] sm:$0xff] %v66
    // Predicated region
    $region26: #{tpu_custom_call.1} parent=1 // pred_check
      _
    $region27: #{tpu_custom_call.1} parent=1 // pred_check_branch
      %69 = sbr.rel (0) target = $region29
    $region28: #{tpu_custom_call.1} parent=1 // pred_region
      %71 = vsyncadd [#allocation4], 0
      %s73 = sshll.u32 [#allocation8], 4
      %s74 = int_to_ptr.vmem [resolvable:$true] %s73
      %s75 = sshll.u32 %s3, 4
      %s76 = int_to_ptr.hbm [resolvable:$true] %s75
      %78 = dma.vmem_to_hbm [thread:$0]  %s74, 768, %s76, [#allocation4]
    $region29: #{tpu_custom_call.1} parent=1 // pred_fallthru
      _
    // Predicated region
    $region30: #{tpu_custom_call.1} parent=1 // pred_check
      _
    $region31: #{tpu_custom_call.1} parent=1 // pred_check_branch
      %80 = sbr.rel (0) target = $region33
    $region32: #{tpu_custom_call.1} parent=1 // pred_region
      %82 = dma.done [#allocation4], 768
    $region33: #{tpu_custom_call.1} parent=1 // pred_fallthru
      _
    %83 = vsyncpa [#allocation3], 1
    %84 = vsyncpa [#allocation6], 1
    %85 = vsyncpa [#allocation4], 1

</llo_original>
